<compile_context>
chip_gen: v7x
topology: tpu7x:2x2x1
jax: 0.10.0
libtpu: 0.0.40
codegen_flags: <defaults>
</compile_context>

<pallas_src>
import functools

import jax
import jax.numpy as jnp
from jax import lax
from jax.experimental import pallas as pl
from jax.experimental.pallas import tpu as pltpu

_LANE = 128


def _sublanes_for(dtype) -> int:
    # Dense sublane packing: (8,128) for 4-byte, (16,128) for 2-byte,
    # (32,128) for 1-byte dtypes.
    itemsize = jnp.dtype(dtype).itemsize
    return {1: 32, 2: 16}.get(itemsize, 8)


def _cil_reduce_kernel(pred_ref, targ_ref, sumsq_ref, sumabs_ref, *,
                       red_axis, blocks_per_core, block_groups, sub_groups,
                       valid_groups, needs_mask, sublanes):
    """Accumulate sum((p-t)^2) and sum(|p-t|) into resident (sublanes,128) blocks."""
    blk = pl.program_id(red_axis)
    if red_axis == 1:                       # core-split layout (v7x)
        block_index = pl.program_id(0) * blocks_per_core + blk
    else:                                   # plain 1-D reduction grid
        block_index = blk

    # Zero the resident accumulators on the first reduction step (per core).
    @pl.when(blk == 0)
    def _():
        sumsq_ref[...] = jnp.zeros_like(sumsq_ref)
        sumabs_ref[...] = jnp.zeros_like(sumabs_ref)

    if needs_mask:
        # Hoisted out of the inner loop (JAX does not CSE broadcast_in_dim).
        base_group = block_index * block_groups
        group_iota = lax.broadcasted_iota(
            jnp.int32, (sub_groups, sublanes, _LANE), 0)

    def body(i, carry):
        ssq, sab = carry
        start = pl.multiple_of(i * sub_groups, sub_groups)
        p = pred_ref[pl.ds(start, sub_groups), :, :].astype(jnp.float32)
        t = targ_ref[pl.ds(start, sub_groups), :, :].astype(jnp.float32)
        d = p - t
        if needs_mask:
            # Ragged last block: zero row-groups past the end of the
            # (row-group aligned) input before they feed the sums.
            valid = (group_iota + (base_group + start)) < valid_groups
            d = jnp.where(valid, d, 0.0)
        # Reducing the leading (non-tiled) axis is pure elementwise vreg
        # addition (VALU only); the single cross-lane reduce happens once in
        # the wrapper on a (sublanes, 128) array.
        ssq = ssq + jnp.sum(d * d, axis=0)
        sab = sab + jnp.sum(jnp.abs(d), axis=0)
        return ssq, sab

    trips = block_groups // sub_groups
    zero = jnp.zeros((sublanes, _LANE), jnp.float32)
    ssq, sab = lax.fori_loop(0, trips, body, (zero, zero),
                             unroll=min(4, trips))
    sumsq_ref[...] += ssq
    sumabs_ref[...] += sab


def cil_loss(predictions, targets, fs, *, tile_rows=4096, num_core_splits=1):
    """fs * MSE(pred, targ) + (1 - fs) * MAE(pred, targ), mean reduction.

    tile_rows:       128-lane rows per input block (tile_rows*128 elements).
                     4096 -> 2 MiB f32 blocks (8 MiB pipelined VMEM total).
    num_core_splits: 1 on single-TensorCore chips (v5e/v6e). Set to 2 on v7x
                     to shard the leading grid axis across both TensorCores
                     via pltpu.CORE_PARALLEL.
    """
    assert predictions.shape == targets.shape
    n_elem = predictions.size
    dtype = jnp.promote_types(predictions.dtype, targets.dtype)
    itemsize = jnp.dtype(dtype).itemsize
    sublanes = _sublanes_for(dtype)
    group_elems = sublanes * _LANE          # one (sublanes, 128) row-group

    pred_flat = predictions.reshape(-1).astype(dtype)
    targ_flat = targets.reshape(-1).astype(dtype)

    # Row-group alignment only (<= one row-group of zero pad, and only when
    # n_elem is not already a multiple of sublanes*128). Block alignment is
    # handled by the in-kernel mask, so we never materialize chunk-padded
    # copies of the full inputs.
    groups = pl.cdiv(n_elem, group_elems)
    pad = groups * group_elems - n_elem
    if pad:
        pred_flat = jnp.pad(pred_flat, (0, pad))
        targ_flat = jnp.pad(targ_flat, (0, pad))
    pred3d = pred_flat.reshape(groups, sublanes, _LANE)
    targ3d = targ_flat.reshape(groups, sublanes, _LANE)

    # Row-groups per block, clamped to the problem size.
    block_groups = max(1, min(tile_rows // sublanes, groups))
    # Inner-loop sub-slice: <= 8 row-groups so the live vreg set stays small
    # (the full-tile diff is never materialized).
    sub_groups = 8
    while block_groups % sub_groups:
        sub_groups //= 2

    nblocks = pl.cdiv(groups, block_groups)
    ncs = int(num_core_splits)
    if ncs > 1:
        nblocks = pl.cdiv(nblocks, ncs) * ncs
        blocks_per_core = nblocks // ncs
        grid = (ncs, blocks_per_core)
        red_axis = 1
        semantics = (pltpu.CORE_PARALLEL, pltpu.ARBITRARY)
        in_map = lambda c, i: (c * blocks_per_core + i, 0, 0)
        out_map = lambda c, i: (c, 0)
    else:
        blocks_per_core = nblocks
        grid = (nblocks,)
        red_axis = 0
        semantics = ("arbitrary",)
        in_map = lambda i: (i, 0, 0)
        out_map = lambda i: (0, 0)

    needs_mask = (nblocks * block_groups != groups)
    out_rows = ncs * sublanes

    kernel = functools.partial(
        _cil_reduce_kernel,
        red_axis=red_axis, blocks_per_core=blocks_per_core,
        block_groups=block_groups, sub_groups=sub_groups,
        valid_groups=groups, needs_mask=needs_mask, sublanes=sublanes)

    # 2 inputs x 2 pipeline buffers; raise the scoped-VMEM budget only when a
    # caller asks for tiles beyond the per-generation defaults, leaving
    # headroom and staying below v7x's 64 MiB physical VMEM per TensorCore.
    block_bytes = block_groups * group_elems * itemsize
    compiler_kwargs = dict(dimension_semantics=semantics)
    pipelined_bytes = 2 * 2 * block_bytes
    if pipelined_bytes > (12 << 20):
        compiler_kwargs["vmem_limit_bytes"] = min(pipelined_bytes + (8 << 20),
                                                  48 << 20)

    cost = pl.CostEstimate(
        flops=5 * n_elem,
        transcendentals=0,
        bytes_accessed=2 * n_elem * itemsize + 2 * out_rows * _LANE * 4,
    )

    sumsq, sumabs = pl.pallas_call(
        kernel,
        out_shape=(
            jax.ShapeDtypeStruct((out_rows, _LANE), jnp.float32),
            jax.ShapeDtypeStruct((out_rows, _LANE), jnp.float32),
        ),
        grid_spec=pltpu.PrefetchScalarGridSpec(
            num_scalar_prefetch=0,
            grid=grid,
            in_specs=[
                pl.BlockSpec((block_groups, sublanes, _LANE), in_map),
                pl.BlockSpec((block_groups, sublanes, _LANE), in_map),
            ],
            out_specs=[
                pl.BlockSpec((sublanes, _LANE), out_map),
                pl.BlockSpec((sublanes, _LANE), out_map),
            ],
        ),
        compiler_params=pltpu.CompilerParams(**compiler_kwargs),
        cost_estimate=cost,
    )(pred3d, targ3d)

    inv_n = 1.0 / n_elem
    mse = jnp.sum(sumsq) * inv_n
    mae = jnp.sum(sumabs) * inv_n
    return fs * mse + (1.0 - fs) * mae


if __name__ == "__main__":
    fs = 0.7
    key = jax.random.PRNGKey(0)
    k1, k2 = jax.random.split(key)

    # Aligned case (numel = 2048 = 2 row-groups): no pad, no mask.
    predictions = jax.random.normal(k1, (2, 4, 16, 16), dtype=jnp.float32)
    targets = jax.random.normal(k2, (2, 4, 16, 16), dtype=jnp.float32)
    loss = cil_loss(predictions, targets, fs)
    jax.block_until_ready(loss)
    diff = predictions - targets
    ref = fs * jnp.mean(diff * diff) + (1.0 - fs) * jnp.mean(jnp.abs(diff))
    assert jnp.allclose(loss, ref, rtol=1e-5, atol=1e-6), (loss, ref)

    # Unaligned case: exercises the tiny row-group pad and the ragged-last-
    # block mask path (tile_rows=16 -> 2 row-groups/block over 3 row-groups).
    p2 = jax.random.normal(k1, (3, 5, 17, 11), dtype=jnp.float32)
    t2 = jax.random.normal(k2, (3, 5, 17, 11), dtype=jnp.float32)
    loss2 = cil_loss(p2, t2, fs, tile_rows=16)
    jax.block_until_ready(loss2)
    d2 = p2 - t2
    ref2 = fs * jnp.mean(d2 * d2) + (1.0 - fs) * jnp.mean(jnp.abs(d2))
    assert jnp.allclose(loss2, ref2, rtol=1e-5, atol=1e-6), (loss2, ref2)

    print("KERNEL_OK")
</pallas_src>

<mosaic_0001>
module attributes {stable_mosaic.version = 11 : i64} {
  func.func @_cil_reduce_kernel(%arg0: i32, %arg1: memref<2x8x128xf32, #tpu.memory_space<vmem>>, %arg2: memref<2x8x128xf32, #tpu.memory_space<vmem>>, %arg3: memref<8x128xf32, #tpu.memory_space<vmem>>, %arg4: memref<8x128xf32, #tpu.memory_space<vmem>>) attributes {dimension_semantics = [#tpu.dimension_semantics<arbitrary>], iteration_bounds = array<i64: 1>, scalar_prefetch = 0 : i64, scratch_operands = 0 : i64, tpu.core_type = #tpu.core_type<tc>, window_params = [{transform_indices = @transform_0, window_bounds = array<i64: 2, 8, 128>}, {transform_indices = @transform_1, window_bounds = array<i64: 2, 8, 128>}, {pipeline_mode = #tpu.pipeline_mode<synchronous>, transform_indices = @transform_2, window_bounds = array<i64: 8, 128>}, {pipeline_mode = #tpu.pipeline_mode<synchronous>, transform_indices = @transform_3, window_bounds = array<i64: 8, 128>}]} {
    %c0_i32 = arith.constant 0 : i32
    %0 = arith.cmpi eq, %arg0, %c0_i32 : i32
    %1 = arith.extui %0 : i1 to i32
    %c0_i32_0 = arith.constant 0 : i32
    %2 = arith.cmpi ne, %1, %c0_i32_0 : i32
    scf.if %2 {
      %cst_15 = arith.constant 0.000000e+00 : f32
      %23 = vector.broadcast %cst_15 : f32 to vector<8x128xf32>
      %c0_16 = arith.constant 0 : index
      %c0_17 = arith.constant 0 : index
      %24 = vector.load %arg3[%c0_16, %c0_17] : memref<8x128xf32, #tpu.memory_space<vmem>>, vector<8x128xf32>
      tpu.vector_store %arg3[%c0_16, %c0_17], %23 {strides = array<i32>} : memref<8x128xf32, #tpu.memory_space<vmem>>, vector<8x128xf32>,
      %cst_18 = arith.constant 0.000000e+00 : f32
      %25 = vector.broadcast %cst_18 : f32 to vector<8x128xf32>
      %c0_19 = arith.constant 0 : index
      %c0_20 = arith.constant 0 : index
      %26 = vector.load %arg4[%c0_19, %c0_20] : memref<8x128xf32, #tpu.memory_space<vmem>>, vector<8x128xf32>
      tpu.vector_store %arg4[%c0_19, %c0_20], %25 {strides = array<i32>} : memref<8x128xf32, #tpu.memory_space<vmem>>, vector<8x128xf32>,
    } else {
    }
    %cst = arith.constant 0.000000e+00 : f32
    %3 = vector.broadcast %cst : f32 to vector<8x128xf32>
    %c0_i32_1 = arith.constant 0 : i32
    %c2_i32 = arith.constant 2 : i32
    %4 = arith.muli %c0_i32_1, %c2_i32 : i32
    %5 = tpu.assume_multiple %4, 2 : i32
    %6 = arith.index_cast %5 : i32 to index
    %c0 = arith.constant 0 : index
    %c0_2 = arith.constant 0 : index
    %7 = vector.load %arg1[%6, %c0, %c0_2] : memref<2x8x128xf32, #tpu.memory_space<vmem>>, vector<2x8x128xf32>
    %8 = arith.index_cast %5 : i32 to index
    %c0_3 = arith.constant 0 : index
    %c0_4 = arith.constant 0 : index
    %9 = vector.load %arg2[%8, %c0_3, %c0_4] : memref<2x8x128xf32, #tpu.memory_space<vmem>>, vector<2x8x128xf32>
    %10 = arith.subf %7, %9 : vector<2x8x128xf32>
    %11 = arith.mulf %10, %10 : vector<2x8x128xf32>
    %cst_5 = arith.constant dense<0.000000e+00> : vector<8x128xf32>
    %12 = vector.multi_reduction <add>, %11, %cst_5 [0] : vector<2x8x128xf32> to vector<8x128xf32>
    %13 = arith.addf %3, %12 : vector<8x128xf32>
    %14 = math.absf %10 : vector<2x8x128xf32>
    %cst_6 = arith.constant dense<0.000000e+00> : vector<8x128xf32>
    %15 = vector.multi_reduction <add>, %14, %cst_6 [0] : vector<2x8x128xf32> to vector<8x128xf32>
    %16 = arith.addf %3, %15 : vector<8x128xf32>
    %c1_i32 = arith.constant 1 : i32
    %c0_7 = arith.constant 0 : index
    %c0_8 = arith.constant 0 : index
    %17 = vector.load %arg3[%c0_7, %c0_8] : memref<8x128xf32, #tpu.memory_space<vmem>>, vector<8x128xf32>
    %18 = arith.addf %17, %13 : vector<8x128xf32>
    %c0_9 = arith.constant 0 : index
    %c0_10 = arith.constant 0 : index
    %19 = vector.load %arg3[%c0_9, %c0_10] : memref<8x128xf32, #tpu.memory_space<vmem>>, vector<8x128xf32>
    tpu.vector_store %arg3[%c0_9, %c0_10], %18 {strides = array<i32>} : memref<8x128xf32, #tpu.memory_space<vmem>>, vector<8x128xf32>,
    %c0_11 = arith.constant 0 : index
    %c0_12 = arith.constant 0 : index
    %20 = vector.load %arg4[%c0_11, %c0_12] : memref<8x128xf32, #tpu.memory_space<vmem>>, vector<8x128xf32>
    %21 = arith.addf %20, %16 : vector<8x128xf32>
    %c0_13 = arith.constant 0 : index
    %c0_14 = arith.constant 0 : index
    %22 = vector.load %arg4[%c0_13, %c0_14] : memref<8x128xf32, #tpu.memory_space<vmem>>, vector<8x128xf32>
    tpu.vector_store %arg4[%c0_13, %c0_14], %21 {strides = array<i32>} : memref<8x128xf32, #tpu.memory_space<vmem>>, vector<8x128xf32>,
    return
  }
  func.func @transform_0(%arg0: i32) -> (i32, i32, i32) {
    %c0_i32 = arith.constant 0 : i32
    %c0_i32_0 = arith.constant 0 : i32
    %c0_i32_1 = arith.constant 0 : i32
    return %arg0, %c0_i32, %c0_i32_0 : i32, i32, i32
  }
  func.func @transform_1(%arg0: i32) -> (i32, i32, i32) {
    %c0_i32 = arith.constant 0 : i32
    %c0_i32_0 = arith.constant 0 : i32
    %c0_i32_1 = arith.constant 0 : i32
    return %arg0, %c0_i32, %c0_i32_0 : i32, i32, i32
  }
  func.func @transform_2(%arg0: i32) -> (i32, i32) {
    %c0_i32 = arith.constant 0 : i32
    %c0_i32_0 = arith.constant 0 : i32
    %c0_i32_1 = arith.constant 0 : i32
    return %c0_i32, %c0_i32_0 : i32, i32
  }
  func.func @transform_3(%arg0: i32) -> (i32, i32) {
    %c0_i32 = arith.constant 0 : i32
    %c0_i32_0 = arith.constant 0 : i32
    %c0_i32_1 = arith.constant 0 : i32
    return %c0_i32, %c0_i32_0 : i32, i32
  }
}

</mosaic_0001>

<llo_original>
// kernel: tpu_custom_call.1
$region0: #{tpu_custom_call.1}
  #allocation0 [shape = 'u32[]', space=smem, size = 0x4, offset = 0x4, fixed_abs, tag = 'smem constant byte address 0x4 - core index']
  #allocation1 [shape = 'u32[144,128]{1,0:T(1,128)}', space=vmem, size = 0x12000, scoped, tag = 'internal scratch']
  %s0 = inlined_call_operand.hbm [shape: f32[2,8,128], index: 0, kind: input, shape index: {}]
  %s1 = inlined_call_operand.hbm [shape: f32[2,8,128], index: 1, kind: input, shape index: {}]
  %s2 = inlined_call_operand.hbm [shape: f32[8,128], index: 2, kind: output, shape index: {0}]
  %s3 = inlined_call_operand.hbm [shape: f32[8,128], index: 3, kind: output, shape index: {1}]
  %4 = xla_tuple %s2, %s3
  %s5 = sld [smem:[#allocation0]]
  $region38: #{tpu_custom_call.1} parent=0
    _
  %s7 = ssub.s32 1, %s5
  %s8 = scalar_select 0, %s7, %s5
  $region1: #{tpu_custom_call.1} parent=0
    #allocation2 [shape = 'u8[8192]{0}', space=vmem, size = 0x2000, scoped, tag = 'input window, operand 0, single buffered']
    #allocation3 [shape = 's32[1]{0}', space=sflag, size = 0x4, scoped, tag = 'scoped memory for tpu_custom_call.1']
    #allocation4 [shape = 's32[1]{0}', space=sflag, size = 0x4, scoped, tag = 'scoped memory for tpu_custom_call.1']
    #allocation5 [shape = 'u8[8192]{0}', space=vmem, size = 0x2000, scoped, tag = 'input window, operand 1, single buffered']
    #allocation6 [shape = 's32[1]{0}', space=sflag, size = 0x4, scoped, tag = 'scoped memory for tpu_custom_call.1']
    #allocation7 [shape = 'u8[4096]{0}', space=vmem, size = 0x1000, scoped, tag = 'output window, operand 0, single buffered']
    #allocation8 [shape = 'u8[4096]{0}', space=vmem, size = 0x1000, scoped, tag = 'output window, operand 1, single buffered']
    #allocation9 [shape = 's32[1]{0}', space=sflag, size = 0x4, scoped, tag = 'scoped memory for tpu_custom_call.1']
    %9 = vsyncpa [#allocation3], 0
    %10 = vsyncpa [#allocation6], 0
    %11 = vsyncpa [#allocation4], 0
    %12 = vsyncpa [#allocation9], 0
    // Predicated region
    $region2: #{tpu_custom_call.1} parent=1 // pred_check
      _
    $region3: #{tpu_custom_call.1} parent=1 // pred_check_branch
      %14 = sbr.rel (0) target = $region5
    $region4: #{tpu_custom_call.1} parent=1 // pred_region
      %s16 = ssub.s32 256, 256
      %17 = vsyncadd [#allocation3], %s16
      %s18 = sshll.u32 [#allocation2], 4
      %s19 = int_to_ptr.vmem [resolvable:$true] %s18
      %24 = dma.hbm_to_vmem [thread:$0]  %s0, 256, %s19, [#allocation3], 128, 128, 8
    $region5: #{tpu_custom_call.1} parent=1 // pred_fallthru
      _
    // Predicated region
    $region6: #{tpu_custom_call.1} parent=1 // pred_check
      _
    $region7: #{tpu_custom_call.1} parent=1 // pred_check_branch
      %26 = sbr.rel (0) target = $region9
    $region8: #{tpu_custom_call.1} parent=1 // pred_region
      %s28 = ssub.s32 256, 256
      %29 = vsyncadd [#allocation6], %s28
      %s30 = sshll.u32 [#allocation5], 4
      %s31 = int_to_ptr.vmem [resolvable:$true] %s30
      %36 = dma.hbm_to_vmem [thread:$0]  %s1, 256, %s31, [#allocation6], 128, 128, 8
    $region9: #{tpu_custom_call.1} parent=1 // pred_fallthru
      _
    // Predicated region
    $region10: #{tpu_custom_call.1} parent=1 // pred_check
      _
    $region11: #{tpu_custom_call.1} parent=1 // pred_check_branch
      %38 = sbr.rel (0) target = $region13
    $region12: #{tpu_custom_call.1} parent=1 // pred_region
      %39 = dma.done [#allocation3], 256
    $region13: #{tpu_custom_call.1} parent=1 // pred_fallthru
      _
    // Predicated region
    $region14: #{tpu_custom_call.1} parent=1 // pred_check
      _
    $region15: #{tpu_custom_call.1} parent=1 // pred_check_branch
      %41 = sbr.rel (0) target = $region17
    $region16: #{tpu_custom_call.1} parent=1 // pred_region
      %42 = dma.done [#allocation6], 256
    $region17: #{tpu_custom_call.1} parent=1 // pred_fallthru
      _
    %p43 = scmp.eq.s32.totalorder 0, 0
    // Predicated region
    $region18: #{tpu_custom_call.1} parent=1 // pred_check
      %p44 = pneg %p43
    $region19: #{tpu_custom_call.1} parent=1 // pred_check_branch
      %46 = sbr.rel (%p44) target = $region21
    $region20: #{tpu_custom_call.1} parent=1 // pred_region
      %47 = vst [vmem:[#allocation7] sm:$0xff] 0.0
      %48 = vst [vmem:[#allocation8] sm:$0xff] 0.0
    $region21: #{tpu_custom_call.1} parent=1 // pred_fallthru
      _
    %s49 = smul.u32 0, 8
    %s50 = scalar_lea.vmem [#allocation2], %s49
    %v51 = vld [vmem:[%s50] sm:$0xff]
    %v52 = vld [vmem:[%s50 + $0x8] sm:$0xff]
    %s53 = scalar_lea.vmem [#allocation5], %s49
    %v54 = vld [vmem:[%s53] sm:$0xff]
    %v55 = vld [vmem:[%s53 + $0x8] sm:$0xff]
    %v56 = vsub.f32 %v51, %v54
    %v57 = vsub.f32 %v52, %v55
    %v58 = vmul.f32 %v56, %v56
    %v59 = vmul.f32 %v57, %v57
    %v60 = vadd.f32 %v58, %v59
    %v61 = vadd.f32 %v60, 0.0
    %v62 = vand.u32 2147483647, %v56
    %v63 = vand.u32 2147483647, %v57
    %v64 = vadd.f32 %v62, %v63
    %v65 = vadd.f32 %v64, 0.0
    %v66 = vld [vmem:[#allocation7] sm:$0xff]
    %v67 = vadd.f32 %v66, %v61
    %68 = vst [vmem:[#allocation7] sm:$0xff] %v67
    %v69 = vld [vmem:[#allocation8] sm:$0xff]
    %v70 = vadd.f32 %v69, %v65
    %71 = vst [vmem:[#allocation8] sm:$0xff] %v70
    // Predicated region
    $region22: #{tpu_custom_call.1} parent=1 // pred_check
      _
    $region23: #{tpu_custom_call.1} parent=1 // pred_check_branch
      %73 = sbr.rel (0) target = $region25
    $region24: #{tpu_custom_call.1} parent=1 // pred_region
      %s75 = ssub.s32 128, 128
      %76 = vsyncadd [#allocation4], %s75
      %s78 = sshll.u32 [#allocation7], 4
      %s79 = int_to_ptr.vmem [resolvable:$true] %s78
      %81 = dma.vmem_to_hbm [thread:$0]  %s79, 128, %s2, [#allocation4]
    $region25: #{tpu_custom_call.1} parent=1 // pred_fallthru
      _
    // Predicated region
    $region26: #{tpu_custom_call.1} parent=1 // pred_check
      _
    $region27: #{tpu_custom_call.1} parent=1 // pred_check_branch
      %83 = sbr.rel (0) target = $region29
    $region28: #{tpu_custom_call.1} parent=1 // pred_region
      %s85 = ssub.s32 128, 128
      %86 = vsyncadd [#allocation9], %s85
      %s88 = sshll.u32 [#allocation8], 4
      %s89 = int_to_ptr.vmem [resolvable:$true] %s88
      %91 = dma.vmem_to_hbm [thread:$0]  %s89, 128, %s3, [#allocation9]
    $region29: #{tpu_custom_call.1} parent=1 // pred_fallthru
      _
    // Predicated region
    $region30: #{tpu_custom_call.1} parent=1 // pred_check
      _
    $region31: #{tpu_custom_call.1} parent=1 // pred_check_branch
      %93 = sbr.rel (0) target = $region33
    $region32: #{tpu_custom_call.1} parent=1 // pred_region
      %94 = dma.done [#allocation4], 128
    $region33: #{tpu_custom_call.1} parent=1 // pred_fallthru
      _
    // Predicated region
    $region34: #{tpu_custom_call.1} parent=1 // pred_check
      _
    $region35: #{tpu_custom_call.1} parent=1 // pred_check_branch
      %96 = sbr.rel (0) target = $region37
    $region36: #{tpu_custom_call.1} parent=1 // pred_region
      %97 = dma.done [#allocation9], 128
    $region37: #{tpu_custom_call.1} parent=1 // pred_fallthru
      _
    %98 = vsyncpa [#allocation3], 1
    %99 = vsyncpa [#allocation6], 1
    %100 = vsyncpa [#allocation4], 1
    %101 = vsyncpa [#allocation9], 1

</llo_original>
